<compile_context>
chip_gen: v7x
topology: tpu7x:2x2x1
jax: 0.10.0
libtpu: 0.0.40
codegen_flags: <defaults>
</compile_context>

<pallas_src>
import functools

import jax
import jax.numpy as jnp
from jax.experimental import pallas as pl
from jax.experimental.pallas import tpu as pltpu


def _example_code_kernel(xyz_ref, p0_ref, p1_ref, w1t_ref, b1_ref,
                         p2_ref, w2t_ref, b2_ref, o_ref):
    f32 = jnp.float32
    x = xyz_ref[0]
    y = xyz_ref[1]
    z = xyz_ref[2]
    # stage 0: x @ mm_param0 ; + y ; relu ; + z
    h = jnp.dot(x, p0_ref[...], preferred_element_type=f32)
    h = jnp.maximum(h + y, 0.0) + z
    # stage 1: h @ mm_param1 ; lin1
    h = jnp.dot(h, p1_ref[...], preferred_element_type=f32)
    h = jnp.dot(h, w1t_ref[...], preferred_element_type=f32) + b1_ref[...]
    # stage 2: relu ; h @ mm_param2
    h = jnp.maximum(h, 0.0)
    h = jnp.dot(h, p2_ref[...], preferred_element_type=f32)
    # stage 3: lin2 ; relu
    h = jnp.dot(h, w2t_ref[...], preferred_element_type=f32) + b2_ref[...]
    o_ref[...] = jnp.maximum(h, 0.0).astype(o_ref.dtype)


@functools.partial(jax.jit, static_argnames=("block_b",))
def example_code_forward(x, y, z, params, block_b=None):
    """params = dict(p0, p1, p2, w1, b1, w2, b2) in torch layouts."""
    B, D = x.shape
    if block_b is None:
        block_b = B  # single grid step: no pipeline / per-step overhead
    assert B % block_b == 0

    # ---- wrapper-side prep: pure layout plumbing, no compute hoisted ----
    p0 = params["p0"]
    p1 = params["p1"]
    p2 = params["p2"]
    w1t = params["w1"].T        # torch Linear: y = x @ W.T + b
    w2t = params["w2"].T
    b1 = params["b1"].reshape(1, D)
    b2 = params["b2"].reshape(1, D)
    # Single activation slab -> one DMA stream instead of three.
    xyz = jnp.stack([x, y, z], axis=0)

    xyz_spec = pl.BlockSpec((3, block_b, D), lambda i: (0, i, 0))
    wgt_spec = pl.BlockSpec((D, D), lambda i: (0, 0))      # grid-invariant
    bias_spec = pl.BlockSpec((1, D), lambda i: (0, 0))
    out_spec = pl.BlockSpec((block_b, D), lambda i: (i, 0))

    cost = pl.CostEstimate(
        flops=int(5 * 2 * B * D * D + 7 * B * D),
        transcendentals=0,
        bytes_accessed=int(4 * (4 * B * D + 5 * D * D + 2 * D)),
    )

    return pl.pallas_call(
        _example_code_kernel,
        out_shape=jax.ShapeDtypeStruct((B, D), x.dtype),
        grid_spec=pltpu.PrefetchScalarGridSpec(
            num_scalar_prefetch=0,
            grid=(B // block_b,),
            in_specs=[xyz_spec,                 # stacked x, y, z
                      wgt_spec,                 # mm_param0
                      wgt_spec,                 # mm_param1
                      wgt_spec, bias_spec,      # lin1: W1^T, b1
                      wgt_spec,                 # mm_param2
                      wgt_spec, bias_spec],     # lin2: W2^T, b2
            out_specs=out_spec,
        ),
        compiler_params=pltpu.CompilerParams(
            dimension_semantics=("parallel",)),
        cost_estimate=cost,
    )(xyz, p0, p1, w1t, b1, p2, w2t, b2)


def reference_forward(x, y, z, params):
    """Straight transcription of the original (unfused) torch forward."""
    with jax.default_matmul_precision("highest"):
        h = x @ params["p0"]
        h = jnp.maximum(h + y, 0.0) + z
        h = h @ params["p1"]
        h = h @ params["w1"].T + params["b1"]
        h = jnp.maximum(h, 0.0)
        h = h @ params["p2"]
        h = h @ params["w2"].T + params["b2"]
        return jnp.maximum(h, 0.0)


if __name__ == "__main__":
    # Small shapes consistent with the module's forward (module spec uses
    # batch_size=256, d_hid=512; we keep TPU-friendly small multiples of the
    # (8, 128) tile so nothing is masked/padded).
    batch_size, d_hid = 8, 128

    key = jax.random.PRNGKey(0)
    keys = jax.random.split(key, 9)

    # Deterministic synthetic parameters (torch.randn analog; Linear weights
    # kept in torch (out, in) layout). Scale 1/sqrt(D) keeps activations O(1)
    # so the numerical comparison is meaningful.
    scale = 1.0 / jnp.sqrt(jnp.float32(d_hid))
    params = {
        "p0": jax.random.normal(keys[0], (d_hid, d_hid), jnp.float32) * scale,
        "p1": jax.random.normal(keys[1], (d_hid, d_hid), jnp.float32) * scale,
        "p2": jax.random.normal(keys[2], (d_hid, d_hid), jnp.float32) * scale,
        "w1": jax.random.normal(keys[3], (d_hid, d_hid), jnp.float32) * scale,
        "b1": jax.random.normal(keys[4], (d_hid,), jnp.float32),
        "w2": jax.random.normal(keys[5], (d_hid, d_hid), jnp.float32) * scale,
        "b2": jax.random.normal(keys[6], (d_hid,), jnp.float32),
    }

    x = jax.random.normal(keys[7], (batch_size, d_hid), jnp.float32)
    y = jax.random.normal(keys[8], (batch_size, d_hid), jnp.float32)
    z = jnp.zeros((batch_size, d_hid), jnp.float32)  # module default z

    out = example_code_forward(x, y, z, params)  # block_b=B -> one grid step
    out = jax.block_until_ready(out)

    ref = reference_forward(x, y, z, params)
    assert out.shape == (batch_size, d_hid)
    # Same op order as the reference; tolerance covers MXU f32 accumulation
    # differences only (real bugs would be O(1) off).
    assert jnp.allclose(out, ref, atol=1e-2, rtol=1e-2), "mismatch vs reference"

    print("KERNEL_OK")
</pallas_src>

<mosaic_0001>
module attributes {stable_mosaic.version = 11 : i64} {
  func.func @_example_code_kernel(%arg0: i32, %arg1: memref<3x8x128xf32, #tpu.memory_space<vmem>>, %arg2: memref<128x128xf32, #tpu.memory_space<vmem>>, %arg3: memref<128x128xf32, #tpu.memory_space<vmem>>, %arg4: memref<128x128xf32, #tpu.memory_space<vmem>>, %arg5: memref<1x128xf32, #tpu.memory_space<vmem>>, %arg6: memref<128x128xf32, #tpu.memory_space<vmem>>, %arg7: memref<128x128xf32, #tpu.memory_space<vmem>>, %arg8: memref<1x128xf32, #tpu.memory_space<vmem>>, %arg9: memref<8x128xf32, #tpu.memory_space<vmem>>) attributes {dimension_semantics = [#tpu.dimension_semantics<parallel>], iteration_bounds = array<i64: 1>, scalar_prefetch = 0 : i64, scratch_operands = 0 : i64, tpu.core_type = #tpu.core_type<tc>, window_params = [{transform_indices = @transform_0, window_bounds = array<i64: 3, 8, 128>}, {pipeline_mode = #tpu.pipeline_mode<synchronous>, transform_indices = @transform_1, window_bounds = array<i64: 128, 128>}, {pipeline_mode = #tpu.pipeline_mode<synchronous>, transform_indices = @transform_2, window_bounds = array<i64: 128, 128>}, {pipeline_mode = #tpu.pipeline_mode<synchronous>, transform_indices = @transform_3, window_bounds = array<i64: 128, 128>}, {pipeline_mode = #tpu.pipeline_mode<synchronous>, transform_indices = @transform_4, window_bounds = array<i64: 1, 128>}, {pipeline_mode = #tpu.pipeline_mode<synchronous>, transform_indices = @transform_5, window_bounds = array<i64: 128, 128>}, {pipeline_mode = #tpu.pipeline_mode<synchronous>, transform_indices = @transform_6, window_bounds = array<i64: 128, 128>}, {pipeline_mode = #tpu.pipeline_mode<synchronous>, transform_indices = @transform_7, window_bounds = array<i64: 1, 128>}, {transform_indices = @transform_8, window_bounds = array<i64: 8, 128>}]} {
    %c0 = arith.constant 0 : index
    %c0_0 = arith.constant 0 : index
    %c0_1 = arith.constant 0 : index
    %0 = vector.load %arg1[%c0, %c0_0, %c0_1] : memref<3x8x128xf32, #tpu.memory_space<vmem>>, vector<1x8x128xf32>
    %1 = vector.shape_cast %0 : vector<1x8x128xf32> to vector<8x128xf32>
    %c1 = arith.constant 1 : index
    %c0_2 = arith.constant 0 : index
    %c0_3 = arith.constant 0 : index
    %2 = vector.load %arg1[%c1, %c0_2, %c0_3] : memref<3x8x128xf32, #tpu.memory_space<vmem>>, vector<1x8x128xf32>
    %3 = vector.shape_cast %2 : vector<1x8x128xf32> to vector<8x128xf32>
    %c2 = arith.constant 2 : index
    %c0_4 = arith.constant 0 : index
    %c0_5 = arith.constant 0 : index
    %4 = vector.load %arg1[%c2, %c0_4, %c0_5] : memref<3x8x128xf32, #tpu.memory_space<vmem>>, vector<1x8x128xf32>
    %5 = vector.shape_cast %4 : vector<1x8x128xf32> to vector<8x128xf32>
    %c0_6 = arith.constant 0 : index
    %c0_7 = arith.constant 0 : index
    %6 = vector.load %arg2[%c0_6, %c0_7] : memref<128x128xf32, #tpu.memory_space<vmem>>, vector<128x128xf32>
    %cst = arith.constant dense<0.000000e+00> : vector<8x128xf32>
    %7 = tpu.matmul %1, %6, %cst {dimension_numbers = #tpu.dot_dimension_numbers<[1], [0], [0], [1], [0, 0, 1, 1], [], []>} : vector<8x128xf32>, vector<128x128xf32>, vector<8x128xf32> -> vector<8x128xf32>
    %8 = arith.addf %7, %3 : vector<8x128xf32>
    %cst_8 = arith.constant 0.000000e+00 : f32
    %9 = vector.broadcast %cst_8 : f32 to vector<8x128xf32>
    %10 = arith.maximumf %8, %9 : vector<8x128xf32>
    %11 = arith.addf %10, %5 : vector<8x128xf32>
    %c0_9 = arith.constant 0 : index
    %c0_10 = arith.constant 0 : index
    %12 = vector.load %arg3[%c0_9, %c0_10] : memref<128x128xf32, #tpu.memory_space<vmem>>, vector<128x128xf32>
    %cst_11 = arith.constant dense<0.000000e+00> : vector<8x128xf32>
    %13 = tpu.matmul %11, %12, %cst_11 {dimension_numbers = #tpu.dot_dimension_numbers<[1], [0], [0], [1], [0, 0, 1, 1], [], []>} : vector<8x128xf32>, vector<128x128xf32>, vector<8x128xf32> -> vector<8x128xf32>
    %c0_12 = arith.constant 0 : index
    %c0_13 = arith.constant 0 : index
    %14 = vector.load %arg4[%c0_12, %c0_13] : memref<128x128xf32, #tpu.memory_space<vmem>>, vector<128x128xf32>
    %cst_14 = arith.constant dense<0.000000e+00> : vector<8x128xf32>
    %15 = tpu.matmul %13, %14, %cst_14 {dimension_numbers = #tpu.dot_dimension_numbers<[1], [0], [0], [1], [0, 0, 1, 1], [], []>} : vector<8x128xf32>, vector<128x128xf32>, vector<8x128xf32> -> vector<8x128xf32>
    %c0_15 = arith.constant 0 : index
    %c0_16 = arith.constant 0 : index
    %16 = vector.load %arg5[%c0_15, %c0_16] : memref<1x128xf32, #tpu.memory_space<vmem>>, vector<1x128xf32>
    %17 = vector.broadcast %16 : vector<1x128xf32> to vector<8x128xf32>
    %18 = arith.addf %15, %17 : vector<8x128xf32>
    %cst_17 = arith.constant 0.000000e+00 : f32
    %19 = vector.broadcast %cst_17 : f32 to vector<8x128xf32>
    %20 = arith.maximumf %18, %19 : vector<8x128xf32>
    %c0_18 = arith.constant 0 : index
    %c0_19 = arith.constant 0 : index
    %21 = vector.load %arg6[%c0_18, %c0_19] : memref<128x128xf32, #tpu.memory_space<vmem>>, vector<128x128xf32>
    %cst_20 = arith.constant dense<0.000000e+00> : vector<8x128xf32>
    %22 = tpu.matmul %20, %21, %cst_20 {dimension_numbers = #tpu.dot_dimension_numbers<[1], [0], [0], [1], [0, 0, 1, 1], [], []>} : vector<8x128xf32>, vector<128x128xf32>, vector<8x128xf32> -> vector<8x128xf32>
    %c0_21 = arith.constant 0 : index
    %c0_22 = arith.constant 0 : index
    %23 = vector.load %arg7[%c0_21, %c0_22] : memref<128x128xf32, #tpu.memory_space<vmem>>, vector<128x128xf32>
    %cst_23 = arith.constant dense<0.000000e+00> : vector<8x128xf32>
    %24 = tpu.matmul %22, %23, %cst_23 {dimension_numbers = #tpu.dot_dimension_numbers<[1], [0], [0], [1], [0, 0, 1, 1], [], []>} : vector<8x128xf32>, vector<128x128xf32>, vector<8x128xf32> -> vector<8x128xf32>
    %c0_24 = arith.constant 0 : index
    %c0_25 = arith.constant 0 : index
    %25 = vector.load %arg8[%c0_24, %c0_25] : memref<1x128xf32, #tpu.memory_space<vmem>>, vector<1x128xf32>
    %26 = vector.broadcast %25 : vector<1x128xf32> to vector<8x128xf32>
    %27 = arith.addf %24, %26 : vector<8x128xf32>
    %cst_26 = arith.constant 0.000000e+00 : f32
    %28 = vector.broadcast %cst_26 : f32 to vector<8x128xf32>
    %29 = arith.maximumf %27, %28 : vector<8x128xf32>
    %c0_27 = arith.constant 0 : index
    %c0_28 = arith.constant 0 : index
    %30 = vector.load %arg9[%c0_27, %c0_28] : memref<8x128xf32, #tpu.memory_space<vmem>>, vector<8x128xf32>
    tpu.vector_store %arg9[%c0_27, %c0_28], %29 {strides = array<i32>} : memref<8x128xf32, #tpu.memory_space<vmem>>, vector<8x128xf32>,
    return
  }
  func.func @transform_0(%arg0: i32) -> (i32, i32, i32) {
    %c0_i32 = arith.constant 0 : i32
    %c0_i32_0 = arith.constant 0 : i32
    %c0_i32_1 = arith.constant 0 : i32
    return %c0_i32, %arg0, %c0_i32_0 : i32, i32, i32
  }
  func.func @transform_1(%arg0: i32) -> (i32, i32) {
    %c0_i32 = arith.constant 0 : i32
    %c0_i32_0 = arith.constant 0 : i32
    %c0_i32_1 = arith.constant 0 : i32
    return %c0_i32, %c0_i32_0 : i32, i32
  }
  func.func @transform_2(%arg0: i32) -> (i32, i32) {
    %c0_i32 = arith.constant 0 : i32
    %c0_i32_0 = arith.constant 0 : i32
    %c0_i32_1 = arith.constant 0 : i32
    return %c0_i32, %c0_i32_0 : i32, i32
  }
  func.func @transform_3(%arg0: i32) -> (i32, i32) {
    %c0_i32 = arith.constant 0 : i32
    %c0_i32_0 = arith.constant 0 : i32
    %c0_i32_1 = arith.constant 0 : i32
    return %c0_i32, %c0_i32_0 : i32, i32
  }
  func.func @transform_4(%arg0: i32) -> (i32, i32) {
    %c0_i32 = arith.constant 0 : i32
    %c0_i32_0 = arith.constant 0 : i32
    %c0_i32_1 = arith.constant 0 : i32
    return %c0_i32, %c0_i32_0 : i32, i32
  }
  func.func @transform_5(%arg0: i32) -> (i32, i32) {
    %c0_i32 = arith.constant 0 : i32
    %c0_i32_0 = arith.constant 0 : i32
    %c0_i32_1 = arith.constant 0 : i32
    return %c0_i32, %c0_i32_0 : i32, i32
  }
  func.func @transform_6(%arg0: i32) -> (i32, i32) {
    %c0_i32 = arith.constant 0 : i32
    %c0_i32_0 = arith.constant 0 : i32
    %c0_i32_1 = arith.constant 0 : i32
    return %c0_i32, %c0_i32_0 : i32, i32
  }
  func.func @transform_7(%arg0: i32) -> (i32, i32) {
    %c0_i32 = arith.constant 0 : i32
    %c0_i32_0 = arith.constant 0 : i32
    %c0_i32_1 = arith.constant 0 : i32
    return %c0_i32, %c0_i32_0 : i32, i32
  }
  func.func @transform_8(%arg0: i32) -> (i32, i32) {
    %c0_i32 = arith.constant 0 : i32
    %c0_i32_0 = arith.constant 0 : i32
    return %arg0, %c0_i32 : i32, i32
  }
}

</mosaic_0001>

<llo_original>
// kernel: example_code_forward.1
$region0: #{example_code_forward.1}
  #allocation0 [shape = 'u32[]', space=smem, size = 0x4, offset = 0x4, fixed_abs, tag = 'smem constant byte address 0x4 - core index']
  #allocation1 [shape = 'u32[144,128]{1,0:T(1,128)}', space=vmem, size = 0x12000, scoped, tag = 'internal scratch']
  %s0 = inlined_call_operand.vmem [shape: f32[3,8,128], index: 0, kind: input, shape index: {}]
  %s1 = inlined_call_operand.vmem [shape: f32[128,128], index: 1, kind: input, shape index: {}]
  %s2 = inlined_call_operand.vmem [shape: f32[128,128], index: 2, kind: input, shape index: {}]
  %s3 = inlined_call_operand.vmem [shape: f32[128,128], index: 3, kind: input, shape index: {}]
  %s4 = inlined_call_operand.vmem [shape: f32[1,128], index: 4, kind: input, shape index: {}]
  %s5 = inlined_call_operand.vmem [shape: f32[128,128], index: 5, kind: input, shape index: {}]
  %s6 = inlined_call_operand.vmem [shape: f32[128,128], index: 6, kind: input, shape index: {}]
  %s7 = inlined_call_operand.vmem [shape: f32[1,128], index: 7, kind: input, shape index: {}]
  %s8 = inlined_call_operand.hbm [shape: f32[8,128], index: 8, kind: output, shape index: {}]
  %s9 = sld [smem:[#allocation0]]
  $region42: #{example_code_forward.1} parent=0
    _
  %s11 = ssub.s32 1, %s9
  %s12 = scalar_select 0, %s11, %s9
  $region1: #{example_code_forward.1} parent=0
    #allocation2 [shape = 'u8[4096]{0}', space=vmem, size = 0x1000, scoped, tag = 'output window, operand 0, single buffered']
    #allocation3 [shape = 's32[1]{0}', space=sflag, size = 0x4, scoped, tag = 'scoped memory for example_code_forward.1']
    %13 = vsyncpa [#allocation3], 0
    // Predicated region
    $region2: #{example_code_forward.1} parent=1 // pred_check
      _
    $region3: #{example_code_forward.1} parent=1 // pred_check_branch
      %15 = sbr.rel (0) target = $region5
    $region4: #{example_code_forward.1} parent=1 // pred_region
      _
    $region5: #{example_code_forward.1} parent=1 // pred_fallthru
      _
    // Predicated region
    $region6: #{example_code_forward.1} parent=1 // pred_check
      _
    $region7: #{example_code_forward.1} parent=1 // pred_check_branch
      %17 = sbr.rel (0) target = $region9
    $region8: #{example_code_forward.1} parent=1 // pred_region
      _
    $region9: #{example_code_forward.1} parent=1 // pred_fallthru
      _
    // Predicated region
    $region10: #{example_code_forward.1} parent=1 // pred_check
      _
    $region11: #{example_code_forward.1} parent=1 // pred_check_branch
      %19 = sbr.rel (0) target = $region13
    $region12: #{example_code_forward.1} parent=1 // pred_region
      _
    $region13: #{example_code_forward.1} parent=1 // pred_fallthru
      _
    // Predicated region
    $region14: #{example_code_forward.1} parent=1 // pred_check
      _
    $region15: #{example_code_forward.1} parent=1 // pred_check_branch
      %21 = sbr.rel (0) target = $region17
    $region16: #{example_code_forward.1} parent=1 // pred_region
      _
    $region17: #{example_code_forward.1} parent=1 // pred_fallthru
      _
    // Predicated region
    $region18: #{example_code_forward.1} parent=1 // pred_check
      _
    $region19: #{example_code_forward.1} parent=1 // pred_check_branch
      %23 = sbr.rel (0) target = $region21
    $region20: #{example_code_forward.1} parent=1 // pred_region
      _
    $region21: #{example_code_forward.1} parent=1 // pred_fallthru
      _
    // Predicated region
    $region22: #{example_code_forward.1} parent=1 // pred_check
      _
    $region23: #{example_code_forward.1} parent=1 // pred_check_branch
      %25 = sbr.rel (0) target = $region25
    $region24: #{example_code_forward.1} parent=1 // pred_region
      _
    $region25: #{example_code_forward.1} parent=1 // pred_fallthru
      _
    // Predicated region
    $region26: #{example_code_forward.1} parent=1 // pred_check
      _
    $region27: #{example_code_forward.1} parent=1 // pred_check_branch
      %27 = sbr.rel (0) target = $region29
    $region28: #{example_code_forward.1} parent=1 // pred_region
      _
    $region29: #{example_code_forward.1} parent=1 // pred_fallthru
      _
    // Predicated region
    $region30: #{example_code_forward.1} parent=1 // pred_check
      _
    $region31: #{example_code_forward.1} parent=1 // pred_check_branch
      %29 = sbr.rel (0) target = $region33
    $region32: #{example_code_forward.1} parent=1 // pred_region
      _
    $region33: #{example_code_forward.1} parent=1 // pred_fallthru
      _
    %v30 = vld [vmem:[%s0] sm:$0xff]
    %s31 = scalar_lea.vmem %s0, 8
    %v32 = vld [vmem:[%s31] sm:$0xff]
    %s33 = scalar_lea.vmem %s0, 16
    %v34 = vld [vmem:[%s33] sm:$0xff]
    %v35 = vld [vmem:[%s1] sm:$0xff]
    %v36 = vld [vmem:[%s1 + $0x8] sm:$0xff]
    %v37 = vld [vmem:[%s1 + $0x10] sm:$0xff]
    %v38 = vld [vmem:[%s1 + $0x18] sm:$0xff]
    %v39 = vld [vmem:[%s1 + $0x20] sm:$0xff]
    %v40 = vld [vmem:[%s1 + $0x28] sm:$0xff]
    %v41 = vld [vmem:[%s1 + $0x30] sm:$0xff]
    %v42 = vld [vmem:[%s1 + $0x38] sm:$0xff]
    %v43 = vld [vmem:[%s1 + $0x40] sm:$0xff]
    %v44 = vld [vmem:[%s1 + $0x48] sm:$0xff]
    %v45 = vld [vmem:[%s1 + $0x50] sm:$0xff]
    %v46 = vld [vmem:[%s1 + $0x58] sm:$0xff]
    %v47 = vld [vmem:[%s1 + $0x60] sm:$0xff]
    %v48 = vld [vmem:[%s1 + $0x68] sm:$0xff]
    %v49 = vld [vmem:[%s1 + $0x70] sm:$0xff]
    %v50 = vld [vmem:[%s1 + $0x78] sm:$0xff]
    %51 = vmatprep.subr.mxu0 0.0
    %52 = vmatpush1.msra.mxu0 %v35
    %53 = vmatprep.subr.mxu0 0.0
    %54 = vmatpush1.msra.mxu0 %v36
    %55 = vmatprep.subr.mxu0 0.0
    %56 = vmatpush1.msra.mxu0 %v37
    %57 = vmatprep.subr.mxu0 0.0
    %58 = vmatpush1.msra.mxu0 %v38
    %59 = vmatprep.subr.mxu0 0.0
    %60 = vmatpush1.msra.mxu0 %v39
    %61 = vmatprep.subr.mxu0 0.0
    %62 = vmatpush1.msra.mxu0 %v40
    %63 = vmatprep.subr.mxu0 0.0
    %64 = vmatpush1.msra.mxu0 %v41
    %65 = vmatprep.subr.mxu0 0.0
    %66 = vmatpush1.msra.mxu0 %v42
    %67 = vmatprep.subr.mxu0 0.0
    %68 = vmatpush1.msra.mxu0 %v43
    %69 = vmatprep.subr.mxu0 0.0
    %70 = vmatpush1.msra.mxu0 %v44
    %71 = vmatprep.subr.mxu0 0.0
    %72 = vmatpush1.msra.mxu0 %v45
    %73 = vmatprep.subr.mxu0 0.0
    %74 = vmatpush1.msra.mxu0 %v46
    %75 = vmatprep.subr.mxu0 0.0
    %76 = vmatpush1.msra.mxu0 %v47
    %77 = vmatprep.subr.mxu0 0.0
    %78 = vmatpush1.msra.mxu0 %v48
    %79 = vmatprep.subr.mxu0 0.0
    %80 = vmatpush1.msra.mxu0 %v49
    %81 = vmatprep.subr.mxu0 0.0
    %82 = vmatpush1.msra.mxu0 %v50
    %83 = vmatprep.subr.mxu0 0.0
    %84 = vmatpush1.msra.mxu0 0.0
    %85 = vmatprep.subr.mxu0 0.0
    %86 = vmatpush1.msra.mxu0 0.0
    %87 = vmatprep.subr.mxu0 0.0
    %88 = vmatpush1.msra.mxu0 0.0
    %89 = vmatprep.subr.mxu0 0.0
    %90 = vmatpush1.msra.mxu0 0.0
    %91 = vmatprep.subr.mxu0 0.0
    %92 = vmatpush1.msra.mxu0 0.0
    %93 = vmatprep.subr.mxu0 0.0
    %94 = vmatpush1.msra.mxu0 0.0
    %95 = vmatprep.subr.mxu0 0.0
    %96 = vmatpush1.msra.mxu0 0.0
    %97 = vmatprep.subr.mxu0 0.0
    %98 = vmatpush1.msra.mxu0 0.0
    %99 = vmatprep.subr.mxu0 0.0
    %100 = vmatpush1.msra.mxu0 0.0
    %101 = vmatprep.subr.mxu0 0.0
    %102 = vmatpush1.msra.mxu0 0.0
    %103 = vmatprep.subr.mxu0 0.0
    %104 = vmatpush1.msra.mxu0 0.0
    %105 = vmatprep.subr.mxu0 0.0
    %106 = vmatpush1.msra.mxu0 0.0
    %107 = vmatprep.subr.mxu0 0.0
    %108 = vmatpush1.msra.mxu0 0.0
    %109 = vmatprep.subr.mxu0 0.0
    %110 = vmatpush1.msra.mxu0 0.0
    %111 = vmatprep.subr.mxu0 0.0
    %112 = vmatpush1.msra.mxu0 0.0
    %113 = vmatprep.subr.mxu0 0.0
    %114 = vmatpush1.msra.mxu0 0.0
    %115 = vmatprep.mubr.f32.mxu0 0.0
    %116 = vmatmul.mubr.f32.gmra.mrb[0].mxu0 %v30
    %v117 = vpop.f32.mrb[0].mxu0
    %v118 = vadd.f32 %v32, %v117
    %v119 = vpop.f32.mrb[0].mxu0
    %120 = vdwg.mxu0
    %v121 = vmax.f32 %v118, 0.0
    %v122 = vadd.f32 %v121, %v34
    %v123 = vld [vmem:[%s2] sm:$0xff]
    %v124 = vld [vmem:[%s2 + $0x8] sm:$0xff]
    %v125 = vld [vmem:[%s2 + $0x10] sm:$0xff]
    %v126 = vld [vmem:[%s2 + $0x18] sm:$0xff]
    %v127 = vld [vmem:[%s2 + $0x20] sm:$0xff]
    %v128 = vld [vmem:[%s2 + $0x28] sm:$0xff]
    %v129 = vld [vmem:[%s2 + $0x30] sm:$0xff]
    %v130 = vld [vmem:[%s2 + $0x38] sm:$0xff]
    %v131 = vld [vmem:[%s2 + $0x40] sm:$0xff]
    %v132 = vld [vmem:[%s2 + $0x48] sm:$0xff]
    %v133 = vld [vmem:[%s2 + $0x50] sm:$0xff]
    %v134 = vld [vmem:[%s2 + $0x58] sm:$0xff]
    %v135 = vld [vmem:[%s2 + $0x60] sm:$0xff]
    %v136 = vld [vmem:[%s2 + $0x68] sm:$0xff]
    %v137 = vld [vmem:[%s2 + $0x70] sm:$0xff]
    %v138 = vld [vmem:[%s2 + $0x78] sm:$0xff]
    %139 = vmatprep.subr.mxu0 0.0
    %140 = vmatpush1.msra.mxu0 %v123
    %141 = vmatprep.subr.mxu0 0.0
    %142 = vmatpush1.msra.mxu0 %v124
    %143 = vmatprep.subr.mxu0 0.0
    %144 = vmatpush1.msra.mxu0 %v125
    %145 = vmatprep.subr.mxu0 0.0
    %146 = vmatpush1.msra.mxu0 %v126
    %147 = vmatprep.subr.mxu0 0.0
    %148 = vmatpush1.msra.mxu0 %v127
    %149 = vmatprep.subr.mxu0 0.0
    %150 = vmatpush1.msra.mxu0 %v128
    %151 = vmatprep.subr.mxu0 0.0
    %152 = vmatpush1.msra.mxu0 %v129
    %153 = vmatprep.subr.mxu0 0.0
    %154 = vmatpush1.msra.mxu0 %v130
    %155 = vmatprep.subr.mxu0 0.0
    %156 = vmatpush1.msra.mxu0 %v131
    %157 = vmatprep.subr.mxu0 0.0
    %158 = vmatpush1.msra.mxu0 %v132
    %159 = vmatprep.subr.mxu0 0.0
    %160 = vmatpush1.msra.mxu0 %v133
    %161 = vmatprep.subr.mxu0 0.0
    %162 = vmatpush1.msra.mxu0 %v134
    %163 = vmatprep.subr.mxu0 0.0
    %164 = vmatpush1.msra.mxu0 %v135
    %165 = vmatprep.subr.mxu0 0.0
    %166 = vmatpush1.msra.mxu0 %v136
    %167 = vmatprep.subr.mxu0 0.0
    %168 = vmatpush1.msra.mxu0 %v137
    %169 = vmatprep.subr.mxu0 0.0
    %170 = vmatpush1.msra.mxu0 %v138
    %171 = vmatprep.subr.mxu0 0.0
    %172 = vmatpush1.msra.mxu0 0.0
    %173 = vmatprep.subr.mxu0 0.0
    %174 = vmatpush1.msra.mxu0 0.0
    %175 = vmatprep.subr.mxu0 0.0
    %176 = vmatpush1.msra.mxu0 0.0
    %177 = vmatprep.subr.mxu0 0.0
    %178 = vmatpush1.msra.mxu0 0.0
    %179 = vmatprep.subr.mxu0 0.0
    %180 = vmatpush1.msra.mxu0 0.0
    %181 = vmatprep.subr.mxu0 0.0
    %182 = vmatpush1.msra.mxu0 0.0
    %183 = vmatprep.subr.mxu0 0.0
    %184 = vmatpush1.msra.mxu0 0.0
    %185 = vmatprep.subr.mxu0 0.0
    %186 = vmatpush1.msra.mxu0 0.0
    %187 = vmatprep.subr.mxu0 0.0
    %188 = vmatpush1.msra.mxu0 0.0
    %189 = vmatprep.subr.mxu0 0.0
    %190 = vmatpush1.msra.mxu0 0.0
    %191 = vmatprep.subr.mxu0 0.0
    %192 = vmatpush1.msra.mxu0 0.0
    %193 = vmatprep.subr.mxu0 0.0
    %194 = vmatpush1.msra.mxu0 0.0
    %195 = vmatprep.subr.mxu0 0.0
    %196 = vmatpush1.msra.mxu0 0.0
    %197 = vmatprep.subr.mxu0 0.0
    %198 = vmatpush1.msra.mxu0 0.0
    %199 = vmatprep.subr.mxu0 0.0
    %200 = vmatpush1.msra.mxu0 0.0
    %201 = vmatprep.subr.mxu0 0.0
    %202 = vmatpush1.msra.mxu0 0.0
    %203 = vmatprep.mubr.f32.mxu0 0.0
    %204 = vmatmul.mubr.f32.gmra.mrb[0].mxu0 %v122
    %v205 = vpop.f32.mrb[0].mxu0
    %v206 = vadd.f32 0.0, %v205
    %v207 = vpop.f32.mrb[0].mxu0
    %208 = vdwg.mxu0
    %v209 = vld [vmem:[%s3] sm:$0xff]
    %v210 = vld [vmem:[%s3 + $0x8] sm:$0xff]
    %v211 = vld [vmem:[%s3 + $0x10] sm:$0xff]
    %v212 = vld [vmem:[%s3 + $0x18] sm:$0xff]
    %v213 = vld [vmem:[%s3 + $0x20] sm:$0xff]
    %v214 = vld [vmem:[%s3 + $0x28] sm:$0xff]
    %v215 = vld [vmem:[%s3 + $0x30] sm:$0xff]
    %v216 = vld [vmem:[%s3 + $0x38] sm:$0xff]
    %v217 = vld [vmem:[%s3 + $0x40] sm:$0xff]
    %v218 = vld [vmem:[%s3 + $0x48] sm:$0xff]
    %v219 = vld [vmem:[%s3 + $0x50] sm:$0xff]
    %v220 = vld [vmem:[%s3 + $0x58] sm:$0xff]
    %v221 = vld [vmem:[%s3 + $0x60] sm:$0xff]
    %v222 = vld [vmem:[%s3 + $0x68] sm:$0xff]
    %v223 = vld [vmem:[%s3 + $0x70] sm:$0xff]
    %v224 = vld [vmem:[%s3 + $0x78] sm:$0xff]
    %v225 = vld [vmem:[%s4] sm:$0x1]
    %v227 = vlaneseq
    %v228 = vshrl.u32 %v227, 7
    %v229 = vsub.s32 0, %v228
    %v230 = vrot.slane %v225, %v229
    %232 = vmatprep.subr.mxu0 0.0
    %233 = vmatpush1.msra.mxu0 %v209
    %234 = vmatprep.subr.mxu0 0.0
    %235 = vmatpush1.msra.mxu0 %v210
    %236 = vmatprep.subr.mxu0 0.0
    %237 = vmatpush1.msra.mxu0 %v211
    %238 = vmatprep.subr.mxu0 0.0
    %239 = vmatpush1.msra.mxu0 %v212
    %240 = vmatprep.subr.mxu0 0.0
    %241 = vmatpush1.msra.mxu0 %v213
    %242 = vmatprep.subr.mxu0 0.0
    %243 = vmatpush1.msra.mxu0 %v214
    %244 = vmatprep.subr.mxu0 0.0
    %245 = vmatpush1.msra.mxu0 %v215
    %246 = vmatprep.subr.mxu0 0.0
    %247 = vmatpush1.msra.mxu0 %v216
    %248 = vmatprep.subr.mxu0 0.0
    %249 = vmatpush1.msra.mxu0 %v217
    %250 = vmatprep.subr.mxu0 0.0
    %251 = vmatpush1.msra.mxu0 %v218
    %252 = vmatprep.subr.mxu0 0.0
    %253 = vmatpush1.msra.mxu0 %v219
    %254 = vmatprep.subr.mxu0 0.0
    %255 = vmatpush1.msra.mxu0 %v220
    %256 = vmatprep.subr.mxu0 0.0
    %257 = vmatpush1.msra.mxu0 %v221
    %258 = vmatprep.subr.mxu0 0.0
    %259 = vmatpush1.msra.mxu0 %v222
    %260 = vmatprep.subr.mxu0 0.0
    %261 = vmatpush1.msra.mxu0 %v223
    %262 = vmatprep.subr.mxu0 0.0
    %263 = vmatpush1.msra.mxu0 %v224
    %264 = vmatprep.subr.mxu0 0.0
    %265 = vmatpush1.msra.mxu0 0.0
    %266 = vmatprep.subr.mxu0 0.0
    %267 = vmatpush1.msra.mxu0 0.0
    %268 = vmatprep.subr.mxu0 0.0
    %269 = vmatpush1.msra.mxu0 0.0
    %270 = vmatprep.subr.mxu0 0.0
    %271 = vmatpush1.msra.mxu0 0.0
    %272 = vmatprep.subr.mxu0 0.0
    %273 = vmatpush1.msra.mxu0 0.0
    %274 = vmatprep.subr.mxu0 0.0
    %275 = vmatpush1.msra.mxu0 0.0
    %276 = vmatprep.subr.mxu0 0.0
    %277 = vmatpush1.msra.mxu0 0.0
    %278 = vmatprep.subr.mxu0 0.0
    %279 = vmatpush1.msra.mxu0 0.0
    %280 = vmatprep.subr.mxu0 0.0
    %281 = vmatpush1.msra.mxu0 0.0
    %282 = vmatprep.subr.mxu0 0.0
    %283 = vmatpush1.msra.mxu0 0.0
    %284 = vmatprep.subr.mxu0 0.0
    %285 = vmatpush1.msra.mxu0 0.0
    %286 = vmatprep.subr.mxu0 0.0
    %287 = vmatpush1.msra.mxu0 0.0
    %288 = vmatprep.subr.mxu0 0.0
    %289 = vmatpush1.msra.mxu0 0.0
    %290 = vmatprep.subr.mxu0 0.0
    %291 = vmatpush1.msra.mxu0 0.0
    %292 = vmatprep.subr.mxu0 0.0
    %293 = vmatpush1.msra.mxu0 0.0
    %294 = vmatprep.subr.mxu0 0.0
    %295 = vmatpush1.msra.mxu0 0.0
    %296 = vmatprep.mubr.f32.mxu0 0.0
    %297 = vmatmul.mubr.f32.gmra.mrb[0].mxu0 %v206
    %v298 = vpop.f32.mrb[0].mxu0
    %v299 = vadd.f32 %v230, %v298
    %v300 = vpop.f32.mrb[0].mxu0
    %301 = vdwg.mxu0
    %v302 = vmax.f32 %v299, 0.0
    %v303 = vld [vmem:[%s5] sm:$0xff]
    %v304 = vld [vmem:[%s5 + $0x8] sm:$0xff]
    %v305 = vld [vmem:[%s5 + $0x10] sm:$0xff]
    %v306 = vld [vmem:[%s5 + $0x18] sm:$0xff]
    %v307 = vld [vmem:[%s5 + $0x20] sm:$0xff]
    %v308 = vld [vmem:[%s5 + $0x28] sm:$0xff]
    %v309 = vld [vmem:[%s5 + $0x30] sm:$0xff]
    %v310 = vld [vmem:[%s5 + $0x38] sm:$0xff]
    %v311 = vld [vmem:[%s5 + $0x40] sm:$0xff]
    %v312 = vld [vmem:[%s5 + $0x48] sm:$0xff]
    %v313 = vld [vmem:[%s5 + $0x50] sm:$0xff]
    %v314 = vld [vmem:[%s5 + $0x58] sm:$0xff]
    %v315 = vld [vmem:[%s5 + $0x60] sm:$0xff]
    %v316 = vld [vmem:[%s5 + $0x68] sm:$0xff]
    %v317 = vld [vmem:[%s5 + $0x70] sm:$0xff]
    %v318 = vld [vmem:[%s5 + $0x78] sm:$0xff]
    %319 = vmatprep.subr.mxu0 0.0
    %320 = vmatpush1.msra.mxu0 %v303
    %321 = vmatprep.subr.mxu0 0.0
    %322 = vmatpush1.msra.mxu0 %v304
    %323 = vmatprep.subr.mxu0 0.0
    %324 = vmatpush1.msra.mxu0 %v305
    %325 = vmatprep.subr.mxu0 0.0
    %326 = vmatpush1.msra.mxu0 %v306
    %327 = vmatprep.subr.mxu0 0.0
    %328 = vmatpush1.msra.mxu0 %v307
    %329 = vmatprep.subr.mxu0 0.0
    %330 = vmatpush1.msra.mxu0 %v308
    %331 = vmatprep.subr.mxu0 0.0
    %332 = vmatpush1.msra.mxu0 %v309
    %333 = vmatprep.subr.mxu0 0.0
    %334 = vmatpush1.msra.mxu0 %v310
    %335 = vmatprep.subr.mxu0 0.0
    %336 = vmatpush1.msra.mxu0 %v311
    %337 = vmatprep.subr.mxu0 0.0
    %338 = vmatpush1.msra.mxu0 %v312
    %339 = vmatprep.subr.mxu0 0.0
    %340 = vmatpush1.msra.mxu0 %v313
    %341 = vmatprep.subr.mxu0 0.0
    %342 = vmatpush1.msra.mxu0 %v314
    %343 = vmatprep.subr.mxu0 0.0
    %344 = vmatpush1.msra.mxu0 %v315
    %345 = vmatprep.subr.mxu0 0.0
    %346 = vmatpush1.msra.mxu0 %v316
    %347 = vmatprep.subr.mxu0 0.0
    %348 = vmatpush1.msra.mxu0 %v317
    %349 = vmatprep.subr.mxu0 0.0
    %350 = vmatpush1.msra.mxu0 %v318
    %351 = vmatprep.subr.mxu0 0.0
    %352 = vmatpush1.msra.mxu0 0.0
    %353 = vmatprep.subr.mxu0 0.0
    %354 = vmatpush1.msra.mxu0 0.0
    %355 = vmatprep.subr.mxu0 0.0
    %356 = vmatpush1.msra.mxu0 0.0
    %357 = vmatprep.subr.mxu0 0.0
    %358 = vmatpush1.msra.mxu0 0.0
    %359 = vmatprep.subr.mxu0 0.0
    %360 = vmatpush1.msra.mxu0 0.0
    %361 = vmatprep.subr.mxu0 0.0
    %362 = vmatpush1.msra.mxu0 0.0
    %363 = vmatprep.subr.mxu0 0.0
    %364 = vmatpush1.msra.mxu0 0.0
    %365 = vmatprep.subr.mxu0 0.0
    %366 = vmatpush1.msra.mxu0 0.0
    %367 = vmatprep.subr.mxu0 0.0
    %368 = vmatpush1.msra.mxu0 0.0
    %369 = vmatprep.subr.mxu0 0.0
    %370 = vmatpush1.msra.mxu0 0.0
    %371 = vmatprep.subr.mxu0 0.0
    %372 = vmatpush1.msra.mxu0 0.0
    %373 = vmatprep.subr.mxu0 0.0
    %374 = vmatpush1.msra.mxu0 0.0
    %375 = vmatprep.subr.mxu0 0.0
    %376 = vmatpush1.msra.mxu0 0.0
    %377 = vmatprep.subr.mxu0 0.0
    %378 = vmatpush1.msra.mxu0 0.0
    %379 = vmatprep.subr.mxu0 0.0
    %380 = vmatpush1.msra.mxu0 0.0
    %381 = vmatprep.subr.mxu0 0.0
    %382 = vmatpush1.msra.mxu0 0.0
    %383 = vmatprep.mubr.f32.mxu0 0.0
    %384 = vmatmul.mubr.f32.gmra.mrb[0].mxu0 %v302
    %v385 = vpop.f32.mrb[0].mxu0
    %v386 = vadd.f32 0.0, %v385
    %v387 = vpop.f32.mrb[0].mxu0
    %388 = vdwg.mxu0
    %v389 = vld [vmem:[%s6] sm:$0xff]
    %v390 = vld [vmem:[%s6 + $0x8] sm:$0xff]
    %v391 = vld [vmem:[%s6 + $0x10] sm:$0xff]
    %v392 = vld [vmem:[%s6 + $0x18] sm:$0xff]
    %v393 = vld [vmem:[%s6 + $0x20] sm:$0xff]
    %v394 = vld [vmem:[%s6 + $0x28] sm:$0xff]
    %v395 = vld [vmem:[%s6 + $0x30] sm:$0xff]
    %v396 = vld [vmem:[%s6 + $0x38] sm:$0xff]
    %v397 = vld [vmem:[%s6 + $0x40] sm:$0xff]
    %v398 = vld [vmem:[%s6 + $0x48] sm:$0xff]
    %v399 = vld [vmem:[%s6 + $0x50] sm:$0xff]
    %v400 = vld [vmem:[%s6 + $0x58] sm:$0xff]
    %v401 = vld [vmem:[%s6 + $0x60] sm:$0xff]
    %v402 = vld [vmem:[%s6 + $0x68] sm:$0xff]
    %v403 = vld [vmem:[%s6 + $0x70] sm:$0xff]
    %v404 = vld [vmem:[%s6 + $0x78] sm:$0xff]
    %v405 = vld [vmem:[%s7] sm:$0x1]
    %v407 = vlaneseq
    %v408 = vshrl.u32 %v407, 7
    %v409 = vsub.s32 0, %v408
    %v410 = vrot.slane %v405, %v409
    %412 = vmatprep.subr.mxu0 0.0
    %413 = vmatpush1.msra.mxu0 %v389
    %414 = vmatprep.subr.mxu0 0.0
    %415 = vmatpush1.msra.mxu0 %v390
    %416 = vmatprep.subr.mxu0 0.0
    %417 = vmatpush1.msra.mxu0 %v391
    %418 = vmatprep.subr.mxu0 0.0
    %419 = vmatpush1.msra.mxu0 %v392
    %420 = vmatprep.subr.mxu0 0.0
    %421 = vmatpush1.msra.mxu0 %v393
    %422 = vmatprep.subr.mxu0 0.0
    %423 = vmatpush1.msra.mxu0 %v394
    %424 = vmatprep.subr.mxu0 0.0
    %425 = vmatpush1.msra.mxu0 %v395
    %426 = vmatprep.subr.mxu0 0.0
    %427 = vmatpush1.msra.mxu0 %v396
    %428 = vmatprep.subr.mxu0 0.0
    %429 = vmatpush1.msra.mxu0 %v397
    %430 = vmatprep.subr.mxu0 0.0
    %431 = vmatpush1.msra.mxu0 %v398
    %432 = vmatprep.subr.mxu0 0.0
    %433 = vmatpush1.msra.mxu0 %v399
    %434 = vmatprep.subr.mxu0 0.0
    %435 = vmatpush1.msra.mxu0 %v400
    %436 = vmatprep.subr.mxu0 0.0
    %437 = vmatpush1.msra.mxu0 %v401
    %438 = vmatprep.subr.mxu0 0.0
    %439 = vmatpush1.msra.mxu0 %v402
    %440 = vmatprep.subr.mxu0 0.0
    %441 = vmatpush1.msra.mxu0 %v403
    %442 = vmatprep.subr.mxu0 0.0
    %443 = vmatpush1.msra.mxu0 %v404
    %444 = vmatprep.subr.mxu0 0.0
    %445 = vmatpush1.msra.mxu0 0.0
    %446 = vmatprep.subr.mxu0 0.0
    %447 = vmatpush1.msra.mxu0 0.0
    %448 = vmatprep.subr.mxu0 0.0
    %449 = vmatpush1.msra.mxu0 0.0
    %450 = vmatprep.subr.mxu0 0.0
    %451 = vmatpush1.msra.mxu0 0.0
    %452 = vmatprep.subr.mxu0 0.0
    %453 = vmatpush1.msra.mxu0 0.0
    %454 = vmatprep.subr.mxu0 0.0
    %455 = vmatpush1.msra.mxu0 0.0
    %456 = vmatprep.subr.mxu0 0.0
    %457 = vmatpush1.msra.mxu0 0.0
    %458 = vmatprep.subr.mxu0 0.0
    %459 = vmatpush1.msra.mxu0 0.0
    %460 = vmatprep.subr.mxu0 0.0
    %461 = vmatpush1.msra.mxu0 0.0
    %462 = vmatprep.subr.mxu0 0.0
    %463 = vmatpush1.msra.mxu0 0.0
    %464 = vmatprep.subr.mxu0 0.0
    %465 = vmatpush1.msra.mxu0 0.0
    %466 = vmatprep.subr.mxu0 0.0
    %467 = vmatpush1.msra.mxu0 0.0
    %468 = vmatprep.subr.mxu0 0.0
    %469 = vmatpush1.msra.mxu0 0.0
    %470 = vmatprep.subr.mxu0 0.0
    %471 = vmatpush1.msra.mxu0 0.0
    %472 = vmatprep.subr.mxu0 0.0
    %473 = vmatpush1.msra.mxu0 0.0
    %474 = vmatprep.subr.mxu0 0.0
    %475 = vmatpush1.msra.mxu0 0.0
    %476 = vmatprep.mubr.f32.mxu0 0.0
    %477 = vmatmul.mubr.f32.gmra.mrb[0].mxu0 %v386
    %v478 = vpop.f32.mrb[0].mxu0
    %v479 = vadd.f32 %v410, %v478
    %v480 = vpop.f32.mrb[0].mxu0
    %481 = vdwg.mxu0
    %v482 = vmax.f32 %v479, 0.0
    %483 = vst [vmem:[#allocation2] sm:$0xff] %v482
    // Predicated region
    $region34: #{example_code_forward.1} parent=1 // pred_check
      _
    $region35: #{example_code_forward.1} parent=1 // pred_check_branch
      %485 = sbr.rel (0) target = $region37
    $region36: #{example_code_forward.1} parent=1 // pred_region
      %s487 = ssub.s32 128, 128
      %488 = vsyncadd [#allocation3], %s487
      %s490 = sshll.u32 [#allocation2], 4
      %s491 = int_to_ptr.vmem [resolvable:$true] %s490
      %493 = dma.vmem_to_hbm [thread:$0]  %s491, 128, %s8, [#allocation3]
    $region37: #{example_code_forward.1} parent=1 // pred_fallthru
      _
    // Predicated region
    $region38: #{example_code_forward.1} parent=1 // pred_check
      _
    $region39: #{example_code_forward.1} parent=1 // pred_check_branch
      %495 = sbr.rel (0) target = $region41
    $region40: #{example_code_forward.1} parent=1 // pred_region
      %496 = dma.done [#allocation3], 128
    $region41: #{example_code_forward.1} parent=1 // pred_fallthru
      _
    %497 = vsyncpa [#allocation3], 1

</llo_original>
